<compile_context>
chip_gen: v6e
topology: v6e:2x2x1
jax: 0.10.0
libtpu: 0.0.40
codegen_flags: <defaults>
</compile_context>

<pallas_src>
import math

import numpy as np

import jax
import jax.numpy as jnp
from jax.experimental import pallas as pl
from jax.experimental.pallas import tpu as pltpu


def _sin_pos_emb_kernel(table_ref, time_ref, out_ref):
    # table_ref: (2, dim) f32 — row 0: [freqs, freqs]; row 1: [0...0, pi/2...pi/2]
    # time_ref:  (TB, 1)  f32 — timestep column for this batch tile
    # out_ref:   (TB, dim) f32 — lane-dense output tile
    tab = table_ref[...]                 # (2, dim), resident constant block
    freqs2 = tab[0:1, :]                 # (1, dim)
    phase = tab[1:2, :]                  # (1, dim)
    # cos(x) = sin(x + pi/2): one broadcast mul + add (VPU), one sin (EUP),
    # one full-width unmasked store — no half-width masked slice stores.
    out_ref[...] = jnp.sin(time_ref[...] * freqs2 + phase)


def _round_up(x: int, m: int) -> int:
    return ((x + m - 1) // m) * m


def _choose_tb(b: int, dim: int, block_b: int) -> int:
    """Batch tile: multiple of 8, divides b, fits VMEM, >=2 grid steps if b>8."""
    # Keep tb*dim*4B double-buffered under ~24 MiB (v7x scoped-VMEM headroom).
    vmem_cap = max(8, ((24 << 20) // (2 * 4 * dim)) // 8 * 8)
    cap = min(block_b, vmem_cap, b)
    if b > 8:
        cap = min(cap, _round_up((b + 1) // 2, 8))   # >= 2 steps for v7x megacore
    cap = max(cap, 8)
    tb = 8
    for cand in range(8, cap + 1, 8):
        if b % cand == 0:
            tb = cand
    return tb


def sinusoidal_position_embeddings(time: jax.Array, dim: int,
                                    *, block_b: int = 1024) -> jax.Array:
    """Equivalent of SinusoidalPositionEmbeddings(dim).forward(time).

    time: (B,) float array of diffusion timesteps.
    returns: (B, dim, 1, 1) float32, matching the PyTorch module.
    """
    assert dim % 2 == 0, "dim must be even (same implicit assumption as PyTorch)"
    assert dim >= 4, "dim must be >= 4 (half_dim - 1 appears in a denominator)"
    half_dim = dim // 2

    # Constant table computed once at trace time with NumPy (no per-step iota/exp):
    #   row 0: frequency table tiled twice; row 1: phase (0 for sin half, pi/2 for cos half).
    scale = math.log(10000.0) / (half_dim - 1)
    freqs_np = np.exp(np.arange(half_dim, dtype=np.float32) * (-scale))
    table_np = np.stack([
        np.concatenate([freqs_np, freqs_np]),
        np.concatenate([np.zeros(half_dim, np.float32),
                        np.full(half_dim, np.pi / 2.0, np.float32)]),
    ]).astype(np.float32)                                   # (2, dim)
    table = jnp.asarray(table_np)

    B = time.shape[0]
    t2 = time.astype(jnp.float32).reshape(B, 1)

    # Pick the batch tile so that it divides B exactly (no pad, no out[:B] copy).
    if B % 8 == 0:
        tb = _choose_tb(B, dim, block_b)
        b_padded = B
    elif B * dim * 4 * 2 <= (24 << 20):
        tb = B                       # single full-extent block (waives (8,128) rule)
        b_padded = B
    else:
        # Rare fallback: large, non-multiple-of-8 batch — pad, then slice once.
        b_padded = _round_up(B, 8)
        tb = _choose_tb(b_padded, dim, block_b)

    if b_padded != B:
        t2 = jnp.pad(t2, ((0, b_padded - B), (0, 0)))
    n_tiles = b_padded // tb

    out = pl.pallas_call(
        _sin_pos_emb_kernel,
        out_shape=jax.ShapeDtypeStruct((b_padded, dim), jnp.float32),
        grid=(n_tiles,),
        in_specs=[
            pl.BlockSpec((2, dim), lambda i: (0, 0)),    # constant table, stays resident
            pl.BlockSpec((tb, 1), lambda i: (i, 0)),     # timestep column tile
        ],
        out_specs=pl.BlockSpec((tb, dim), lambda i: (i, 0)),
        compiler_params=pltpu.CompilerParams(
            dimension_semantics=("parallel",),
        ),
    )(table, t2)

    if b_padded != B:
        out = out[:B]
    return out.reshape(B, dim, 1, 1)


def _reference(time: jax.Array, dim: int) -> jax.Array:
    """Pure-JAX reference mirroring the PyTorch module."""
    half_dim = dim // 2
    scale = math.log(10000.0) / (half_dim - 1)
    freqs = jnp.exp(jnp.arange(half_dim, dtype=jnp.float32) * (-scale))
    args = time.astype(jnp.float32)[:, None] * freqs[None, :]
    emb = jnp.concatenate([jnp.sin(args), jnp.cos(args)], axis=-1)
    return emb.reshape(*emb.shape, 1, 1)


if __name__ == "__main__":
    key = jax.random.PRNGKey(0)
    B, DIM = 8, 32  # small demo shapes: batch of 8 timesteps, embedding dim 32

    # deterministic example "time" input (diffusion timesteps)
    time = jax.random.uniform(key, (B,), dtype=jnp.float32, minval=0.0, maxval=1000.0)

    out = sinusoidal_position_embeddings(time, DIM)
    out = jax.block_until_ready(out)

    ref = _reference(time, DIM)
    assert out.shape == (B, DIM, 1, 1), out.shape
    assert out.dtype == jnp.float32, out.dtype
    # cos(x) is produced as sin(x + pi/2); the only divergence from the direct
    # cos reference is the f32 rounding of the (arg + pi/2) add (~ulp(arg),
    # a few e-5 at timestep magnitudes ~1e3), so compare with atol=1e-4.
    assert jnp.allclose(out, ref, atol=1e-4, rtol=1e-5), "mismatch vs reference"

    print("KERNEL_OK")
</pallas_src>

<mosaic_0001>
module attributes {stable_mosaic.version = 11 : i64} {
  func.func @_sin_pos_emb_kernel(%arg0: i32, %arg1: memref<2x32xf32, #tpu.memory_space<vmem>>, %arg2: memref<8x1xf32, #tpu.memory_space<vmem>>, %arg3: memref<8x32xf32, #tpu.memory_space<vmem>>) attributes {dimension_semantics = [#tpu.dimension_semantics<parallel>], iteration_bounds = array<i64: 1>, scalar_prefetch = 0 : i64, scratch_operands = 0 : i64, tpu.core_type = #tpu.core_type<tc>, window_params = [{pipeline_mode = #tpu.pipeline_mode<synchronous>, transform_indices = @transform_0, window_bounds = array<i64: 2, 32>}, {transform_indices = @transform_1, window_bounds = array<i64: 8, 1>}, {transform_indices = @transform_2, window_bounds = array<i64: 8, 32>}]} {
    %c0 = arith.constant 0 : index
    %c0_0 = arith.constant 0 : index
    %0 = vector.load %arg1[%c0, %c0_0] : memref<2x32xf32, #tpu.memory_space<vmem>>, vector<2x32xf32>
    %1 = vector.extract_strided_slice %0 {offsets = [0, 0], sizes = [1, 32], strides = [1, 1]} : vector<2x32xf32> to vector<1x32xf32>
    %2 = vector.extract_strided_slice %0 {offsets = [1, 0], sizes = [1, 32], strides = [1, 1]} : vector<2x32xf32> to vector<1x32xf32>
    %c0_1 = arith.constant 0 : index
    %c0_2 = arith.constant 0 : index
    %3 = vector.load %arg2[%c0_1, %c0_2] : memref<8x1xf32, #tpu.memory_space<vmem>>, vector<8x1xf32>
    %4 = vector.broadcast %3 : vector<8x1xf32> to vector<8x32xf32>
    %5 = vector.broadcast %1 : vector<1x32xf32> to vector<8x32xf32>
    %6 = arith.mulf %4, %5 : vector<8x32xf32>
    %7 = vector.broadcast %2 : vector<1x32xf32> to vector<8x32xf32>
    %8 = arith.addf %6, %7 : vector<8x32xf32>
    %9 = math.sin %8 : vector<8x32xf32>
    %c0_3 = arith.constant 0 : index
    %c0_4 = arith.constant 0 : index
    %10 = vector.load %arg3[%c0_3, %c0_4] : memref<8x32xf32, #tpu.memory_space<vmem>>, vector<8x32xf32>
    tpu.vector_store %arg3[%c0_3, %c0_4], %9 {strides = array<i32>} : memref<8x32xf32, #tpu.memory_space<vmem>>, vector<8x32xf32>,
    return
  }
  func.func @transform_0(%arg0: i32) -> (i32, i32) {
    %c0_i32 = arith.constant 0 : i32
    %c0_i32_0 = arith.constant 0 : i32
    %c0_i32_1 = arith.constant 0 : i32
    return %c0_i32, %c0_i32_0 : i32, i32
  }
  func.func @transform_1(%arg0: i32) -> (i32, i32) {
    %c0_i32 = arith.constant 0 : i32
    %c0_i32_0 = arith.constant 0 : i32
    return %arg0, %c0_i32 : i32, i32
  }
  func.func @transform_2(%arg0: i32) -> (i32, i32) {
    %c0_i32 = arith.constant 0 : i32
    %c0_i32_0 = arith.constant 0 : i32
    return %arg0, %c0_i32 : i32, i32
  }
}

</mosaic_0001>

<llo_original>
// kernel: tpu_custom_call.1
$region0: #{tpu_custom_call.1}
  #allocation0 [shape = 'u32[]', space=smem, size = 0x4, offset = 0x4, fixed_abs, tag = 'smem constant byte address 0x4 - core index']
  #allocation1 [shape = 'u32[144,128]{1,0:T(1,128)}', space=vmem, size = 0x12000, scoped, tag = 'internal scratch']
  %s0 = inlined_call_operand.vmem [shape: f32[2,32], index: 0, kind: input, shape index: {}]
  %s1 = inlined_call_operand.vmem [shape: f32[8,1], index: 1, kind: input, shape index: {}]
  %s2 = inlined_call_operand.hbm [shape: f32[8,32], index: 2, kind: output, shape index: {}]
  %s3 = sld [smem:[#allocation0]]
  $region18: #{tpu_custom_call.1} parent=0
    _
  %s5 = ssub.s32 1, %s3
  %s6 = scalar_select 0, %s5, %s3
  $region1: #{tpu_custom_call.1} parent=0
    #allocation2 [shape = 'u8[4096]{0}', space=vmem, size = 0x1000, scoped, tag = 'output window, operand 0, single buffered']
    #allocation3 [shape = 's32[1]{0}', space=sflag, size = 0x4, scoped, tag = 'scoped memory for tpu_custom_call.1']
    %7 = vsyncpa [#allocation3], 0
    // Predicated region
    $region2: #{tpu_custom_call.1} parent=1 // pred_check
      _
    $region3: #{tpu_custom_call.1} parent=1 // pred_check_branch
      %9 = sbr.rel (0) target = $region5
    $region4: #{tpu_custom_call.1} parent=1 // pred_region
      _
    $region5: #{tpu_custom_call.1} parent=1 // pred_fallthru
      _
    // Predicated region
    $region6: #{tpu_custom_call.1} parent=1 // pred_check
      _
    $region7: #{tpu_custom_call.1} parent=1 // pred_check_branch
      %11 = sbr.rel (0) target = $region9
    $region8: #{tpu_custom_call.1} parent=1 // pred_region
      _
    $region9: #{tpu_custom_call.1} parent=1 // pred_fallthru
      _
    %v12 = vld [vmem:[%s0] sm:$0x3]
    %v13 = vld [vmem:[%s1] sm:$0xff]
    %15 = vset.pattern.permute.xlu0 0
    %16 = vperm.xlu0 %15, %v13
    %v17 = vpop.permute.xlu0 %16
    %v19 = vlaneseq
    %v20 = vshrl.u32 %v19, 7
    %v21 = vsub.s32 0, %v20
    %v22 = vrot.slane %v12, %v21
    %v23 = vmul.f32 %v17, %v22
    %v24 = vlaneseq
    %v25 = vshrl.u32 %v24, 7
    %v26 = vsub.s32 1, %v25
    %v27 = vrot.slane %v12, %v26
    %v28 = vadd.f32 %v23, %v27
    %v29 = vand.u32 2147483647, %v28
    %vm30 = vcmp.le.f32.partialorder %v29, 0.7853982
    %vm31 = vcmp.lt.s32.totalorder %v28, 0
    %v32 = vand.u32 %v28, 2139095040
    %v33 = vshrl.u32 %v32, 23
    %v34 = vsub.s32 %v33, 127
    %v35 = vand.u32 2147483647, %v28
    %v36 = vand.u32 %v35, 8388607
    %v37 = vor.u32 %v36, 8388608
    %v38 = vsub.s32 0, %v37
    %v39 = vadd.s32 %v34, 1
    %vm40 = vcmp.gt.s32.totalorder %v39, 0
    %v41 = vsel %vm40, %v39, 0
    %v42 = vshrl.u32 %v41, 5
    %v43 = vand.u32 %v41, 31
    %v44 = vsub.s32 32, %v43
    %v45 = vshrl.u32 683565275, %v44
    %v46 = vshll.u32 683565275, %v43
    %v47 = vshrl.u32 2475754826, %v44
    %v48 = vor.u32 %v46, %v47
    %v49 = vshll.u32 2475754826, %v43
    %v50 = vshrl.u32 2131351028, %v44
    %v51 = vor.u32 %v49, %v50
    %v52 = vshll.u32 2131351028, %v43
    %v53 = vshrl.u32 2102212464, %v44
    %v54 = vor.u32 %v52, %v53
    %v55 = vshll.u32 2102212464, %v43
    %v56 = vshrl.u32 920167782, %v44
    %v57 = vor.u32 %v55, %v56
    %v58 = vshll.u32 920167782, %v43
    %v59 = vshrl.u32 1326507024, %v44
    %v60 = vor.u32 %v58, %v59
    %vm61 = vcmp.lt.s32.totalorder %v42, 1
    %vm62 = vcmp.lt.s32.totalorder %v42, 2
    %vm63 = vcmp.lt.s32.totalorder %v42, 3
    %vm64 = vcmp.lt.s32.totalorder %v42, 4
    %v65 = vsel %vm61, %v45, %v48
    %v66 = vsel %vm64, %v54, 2102212464
    %v67 = vsel %vm63, %v51, %v66
    %v68 = vsel %vm62, %v65, %v67
    %v69 = vsel %vm61, %v48, %v51
    %v70 = vsel %vm64, %v57, 920167782
    %v71 = vsel %vm63, %v54, %v70
    %v72 = vsel %vm62, %v69, %v71
    %v73 = vsel %vm61, %v51, %v54
    %v74 = vsel %vm64, %v60, 1326507024
    %v75 = vsel %vm63, %v57, %v74
    %v76 = vsel %vm62, %v73, %v75
    %v77 = vshll.u32 %v37, 8
    %v78 = vmul.u32.u64.compose %v77, %v76
    %v79 = vextract.low.u32 %v78
    %v80 = vextract.high.u32 %v78
    %v81 = vmul.u32.u64.compose %v77, %v72
    %v82 = vextract.low.u32 %v81
    %v83 = vextract.high.u32 %v81
    %v84 = vmul.u32 %v77, %v68
    %v85 = vadd.s32 %v80, %v82
    %vm86 = vc.u32 %v80, %v82
    %v87 = vadd.s32 %v83, 1
    %v88 = vsel %vm86, %v87, %v83
    %v89 = vadd.s32 %v84, %v88
    %v90 = vadd.s32 %v89, 536870912
    %v91 = vshrl.u32 %v90, 30
    %v92 = vshll.u32 %v91, 30
    %v93 = vsub.s32 %v89, %v92
    %vm94 = vcmp.lt.s32.totalorder %v93, 0
    %v95 = vsub.s32 0, %v93
    %v96 = vsel %vm94, %v95, %v93
    %v97 = vclz %v96
    %v98 = vsub.s32 %v97, 2
    %vm99 = vcmp.gt.s32.totalorder 0, %v98
    %v100 = vsel %vm99, 0, %v98
    %v101 = vsub.s32 32, %v100
    %v102 = vshll.u32 %v93, %v100
    %v103 = vshrl.u32 %v85, %v101
    %v104 = vor.u32 %v102, %v103
    %v105 = vsub.s32 4294967266, %v100
    %v106 = vadd.s32 %v105, 127
    %v107 = vshll.u32 %v106, 23
    %v108 = vor.u32 4788187, %v107
    %v109 = vand.u32 2147483647, %v108
    %v111 = vcvt.s32.f32 %v104
    %v112 = vmul.f32 %v111, %v109
    %v113 = vxor.u32 %v112, 2147483648
    %v114 = vsel %vm31, %v113, %v112
    %v115 = vsub.s32 4, %v91
    %v116 = vsel %vm31, %v115, %v91
    %v117 = vsel %vm30, %v28, %v114
    %v118 = vsel %vm30, 0, %v116
    %v119 = vcosq.f32.pop %v117
    %v120 = vsinq.f32.pop %v117
    %vm121 = vweird.f32 %v28
    %v122 = vadd.s32 %v118, 3
    %v123 = vand.u32 %v122, 3
    %vm124 = vcmp.lt.s32.totalorder %v123, 2
    %vm125 = vcmp.eq.s32.totalorder %v123, 0
    %v126 = vxor.u32 %v120, 2147483648
    %v127 = vsel %vm125, %v119, %v126
    %vm128 = vcmp.eq.s32.totalorder %v123, 2
    %v129 = vxor.u32 %v119, 2147483648
    %v130 = vsel %vm128, %v129, %v120
    %v131 = vsel %vm124, %v127, %v130
    %v132 = vsel %vm121, nan, %v131
    %vm133 = vcmask 261120
    %134 = vst.msk [vmem:[#allocation2] sm:$0xff] %vm133, %v132
    // Predicated region
    $region10: #{tpu_custom_call.1} parent=1 // pred_check
      _
    $region11: #{tpu_custom_call.1} parent=1 // pred_check_branch
      %136 = sbr.rel (0) target = $region13
    $region12: #{tpu_custom_call.1} parent=1 // pred_region
      %s138 = ssub.s32 128, 128
      %139 = vsyncadd [#allocation3], %s138
      %s141 = sshll.u32 [#allocation2], 4
      %s142 = int_to_ptr.vmem [resolvable:$true] %s141
      %144 = dma.vmem_to_hbm [thread:$0]  %s142, 128, %s2, [#allocation3]
    $region13: #{tpu_custom_call.1} parent=1 // pred_fallthru
      _
    // Predicated region
    $region14: #{tpu_custom_call.1} parent=1 // pred_check
      _
    $region15: #{tpu_custom_call.1} parent=1 // pred_check_branch
      %146 = sbr.rel (0) target = $region17
    $region16: #{tpu_custom_call.1} parent=1 // pred_region
      %147 = dma.done [#allocation3], 128
    $region17: #{tpu_custom_call.1} parent=1 // pred_fallthru
      _
    %148 = vsyncpa [#allocation3], 1

</llo_original>
